<compile_context>
chip_gen: v7x
topology: tpu7x:2x2x1
jax: 0.10.0
libtpu: 0.0.40
codegen_flags: <defaults>
</compile_context>

<pallas_src>
import functools

import jax
import jax.numpy as jnp
from jax.experimental import pallas as pl
from jax.experimental.pallas import tpu as pltpu


MARGIN = 1.0
EPS = 1e-6  # PyTorch pairwise_distance eps (added to the difference, then normed)

_LANE = 128
_SUBLANE = 8


def _round_up(x, m):
    return (x + m - 1) // m * m


def _triplet_kernel(a_ref, p_ref, n_ref, w_ref, b_ref, out_ref, *, d_emb):
    """One batch block.

    a_ref/p_ref/n_ref : (tb, D_in_pad)       anchor / positive / negative rows
    w_ref             : (D_in_pad, D_emb_pad) encoder weight (resident across grid)
    b_ref             : (1, D_emb_pad)        encoder bias   (resident across grid)
    out_ref           : (1, tb)               per-example hinge loss (lane-dense row)
    """
    w = w_ref[...]
    bias = b_ref[...]

    def encode(x_ref):
        # Synthetic encoder: MXU matmul in f32 accumulation + bias + tanh (EUP).
        h = jnp.dot(x_ref[...], w, preferred_element_type=jnp.float32)
        return jnp.tanh(h + bias)

    ea = encode(a_ref)                                  # (tb, D_emb_pad), f32
    ep = encode(p_ref)
    en = encode(n_ref)

    # PyTorch TripletMarginLoss(margin, p=2, eps=1e-6):
    #   d(x, y) = || x - y + eps ||_2 ; loss = max(d(a,p) - d(a,n) + margin, 0)
    # eps is masked to the real (unpadded) embedding lanes so zero-padded lanes
    # contribute exactly 0 under the norm.  Skip the mask when no lane padding.
    d_emb_pad = ea.shape[-1]
    if d_emb == d_emb_pad:
        eps_row = jnp.float32(EPS)
    else:
        lane = jax.lax.broadcasted_iota(jnp.int32, (1, d_emb_pad), 1)
        eps_row = jnp.where(lane < d_emb, jnp.float32(EPS), jnp.float32(0.0))

    d_ap = jnp.sqrt(jnp.sum((ea - ep + eps_row) ** 2, axis=-1))   # (tb,)
    d_an = jnp.sqrt(jnp.sum((ea - en + eps_row) ** 2, axis=-1))   # (tb,)
    hinge = jnp.maximum(d_ap - d_an + MARGIN, 0.0)                # (tb,)

    out_ref[...] = hinge.reshape(1, -1)                           # (1, tb) lane-dense


def contextual_tmn_forward(anchor, positive, negative, w, b, *,
                           block_b=1024, stream_dtype=jnp.float32):
    """Returns the scalar triplet-margin loss (float32)."""
    B, D_in = anchor.shape
    D_emb = w.shape[1]

    # Lane-dense feature dims (never padded past the next 128 — kernel is
    # HBM-bound, wider MXU occupancy is not worth the bandwidth).
    d_in_p = _round_up(D_in, _LANE)
    d_emb_p = _round_up(D_emb, _LANE)

    # Batch tile: sublane-aligned, capped at ceil(B/2) so there are >= 2 grid
    # steps whenever B > 8 (lets v7x's two TensorCores split the "parallel"
    # axis), bounded by block_b for the VMEM / per-step-overhead trade-off.
    tb = min(_round_up(block_b, _SUBLANE),
             _round_up(B, _SUBLANE),
             _round_up(pl.cdiv(B, 2), _SUBLANE))
    b_pad = _round_up(B, tb)
    g = b_pad // tb

    def pad2(x, rows, cols, dtype):
        x = x.astype(dtype)
        return jnp.pad(x, ((0, rows - x.shape[0]), (0, cols - x.shape[1])))

    # At aligned shapes these pads/casts are no-ops (XLA elides them).
    a_p = pad2(anchor, b_pad, d_in_p, stream_dtype)
    p_p = pad2(positive, b_pad, d_in_p, stream_dtype)
    n_p = pad2(negative, b_pad, d_in_p, stream_dtype)
    w_p = pad2(w, d_in_p, d_emb_p, stream_dtype)
    b_p = pad2(b.reshape(1, -1), 1, d_emb_p, jnp.float32)

    kernel = functools.partial(_triplet_kernel, d_emb=D_emb)

    x_spec = pl.BlockSpec((tb, d_in_p), lambda i: (i, 0))
    per_block = pl.pallas_call(
        kernel,
        out_shape=jax.ShapeDtypeStruct((g, tb), jnp.float32),
        grid=(g,),
        in_specs=[
            x_spec,                                               # anchor block
            x_spec,                                               # positive block
            x_spec,                                               # negative block
            pl.BlockSpec((d_in_p, d_emb_p), lambda i: (0, 0)),    # W (resident)
            pl.BlockSpec((1, d_emb_p), lambda i: (0, 0)),         # bias (resident)
        ],
        out_specs=pl.BlockSpec((1, tb), lambda i: (i, 0)),        # lane-dense row
        compiler_params=pltpu.CompilerParams(
            dimension_semantics=("parallel",),
        ),
    )(a_p, p_p, n_p, w_p, b_p)

    # Finish the batch mean in the wrapper; padded rows are simply dropped.
    per_example = per_block.reshape(-1)[:B]
    return jnp.sum(per_example) / B


def _reference(anchor, positive, negative, w, b):
    enc = lambda x: jnp.tanh(x @ w + b)
    ea, ep, en = enc(anchor), enc(positive), enc(negative)
    d_ap = jnp.sqrt(jnp.sum((ea - ep + EPS) ** 2, axis=-1))
    d_an = jnp.sqrt(jnp.sum((ea - en + EPS) ** 2, axis=-1))
    return jnp.mean(jnp.maximum(d_ap - d_an + MARGIN, 0.0))


if __name__ == "__main__":
    B, D_in, D_emb = 8, 64, 32

    key = jax.random.PRNGKey(0)
    ka, kp, kn, kw, kb = jax.random.split(key, 5)

    anchor = jax.random.normal(ka, (B, D_in), dtype=jnp.float32)
    positive = jax.random.normal(kp, (B, D_in), dtype=jnp.float32)
    negative = jax.random.normal(kn, (B, D_in), dtype=jnp.float32)

    # Deterministic synthetic encoder parameters.
    w = jax.random.normal(kw, (D_in, D_emb), dtype=jnp.float32) * 0.1
    b = jax.random.normal(kb, (1, D_emb), dtype=jnp.float32) * 0.01

    loss = contextual_tmn_forward(anchor, positive, negative, w, b)
    jax.block_until_ready(loss)

    ref = _reference(anchor, positive, negative, w, b)
    assert jnp.allclose(loss, ref, rtol=1e-5, atol=1e-5), (loss, ref)

    print("KERNEL_OK")
</pallas_src>

<mosaic_0001>
module attributes {stable_mosaic.version = 11 : i64} {
  func.func @_triplet_kernel(%arg0: i32, %arg1: memref<8x128xf32, #tpu.memory_space<vmem>>, %arg2: memref<8x128xf32, #tpu.memory_space<vmem>>, %arg3: memref<8x128xf32, #tpu.memory_space<vmem>>, %arg4: memref<128x128xf32, #tpu.memory_space<vmem>>, %arg5: memref<1x128xf32, #tpu.memory_space<vmem>>, %arg6: memref<1x8xf32, #tpu.memory_space<vmem>>) attributes {dimension_semantics = [#tpu.dimension_semantics<parallel>], iteration_bounds = array<i64: 1>, scalar_prefetch = 0 : i64, scratch_operands = 0 : i64, tpu.core_type = #tpu.core_type<tc>, window_params = [{transform_indices = @transform_0, window_bounds = array<i64: 8, 128>}, {transform_indices = @transform_1, window_bounds = array<i64: 8, 128>}, {transform_indices = @transform_2, window_bounds = array<i64: 8, 128>}, {pipeline_mode = #tpu.pipeline_mode<synchronous>, transform_indices = @transform_3, window_bounds = array<i64: 128, 128>}, {pipeline_mode = #tpu.pipeline_mode<synchronous>, transform_indices = @transform_4, window_bounds = array<i64: 1, 128>}, {transform_indices = @transform_5, window_bounds = array<i64: 1, 8>}]} {
    %c0 = arith.constant 0 : index
    %c0_0 = arith.constant 0 : index
    %0 = vector.load %arg4[%c0, %c0_0] : memref<128x128xf32, #tpu.memory_space<vmem>>, vector<128x128xf32>
    %c0_1 = arith.constant 0 : index
    %c0_2 = arith.constant 0 : index
    %1 = vector.load %arg5[%c0_1, %c0_2] : memref<1x128xf32, #tpu.memory_space<vmem>>, vector<1x128xf32>
    %c0_3 = arith.constant 0 : index
    %c0_4 = arith.constant 0 : index
    %2 = vector.load %arg1[%c0_3, %c0_4] : memref<8x128xf32, #tpu.memory_space<vmem>>, vector<8x128xf32>
    %cst = arith.constant dense<0.000000e+00> : vector<8x128xf32>
    %3 = tpu.matmul %2, %0, %cst {dimension_numbers = #tpu.dot_dimension_numbers<[1], [0], [0], [1], [0, 0, 1, 1], [], []>} : vector<8x128xf32>, vector<128x128xf32>, vector<8x128xf32> -> vector<8x128xf32>
    %4 = vector.broadcast %1 : vector<1x128xf32> to vector<8x128xf32>
    %5 = arith.addf %3, %4 : vector<8x128xf32>
    %6 = math.tanh %5 : vector<8x128xf32>
    %c0_5 = arith.constant 0 : index
    %c0_6 = arith.constant 0 : index
    %7 = vector.load %arg2[%c0_5, %c0_6] : memref<8x128xf32, #tpu.memory_space<vmem>>, vector<8x128xf32>
    %cst_7 = arith.constant dense<0.000000e+00> : vector<8x128xf32>
    %8 = tpu.matmul %7, %0, %cst_7 {dimension_numbers = #tpu.dot_dimension_numbers<[1], [0], [0], [1], [0, 0, 1, 1], [], []>} : vector<8x128xf32>, vector<128x128xf32>, vector<8x128xf32> -> vector<8x128xf32>
    %9 = vector.broadcast %1 : vector<1x128xf32> to vector<8x128xf32>
    %10 = arith.addf %8, %9 : vector<8x128xf32>
    %11 = math.tanh %10 : vector<8x128xf32>
    %c0_8 = arith.constant 0 : index
    %c0_9 = arith.constant 0 : index
    %12 = vector.load %arg3[%c0_8, %c0_9] : memref<8x128xf32, #tpu.memory_space<vmem>>, vector<8x128xf32>
    %cst_10 = arith.constant dense<0.000000e+00> : vector<8x128xf32>
    %13 = tpu.matmul %12, %0, %cst_10 {dimension_numbers = #tpu.dot_dimension_numbers<[1], [0], [0], [1], [0, 0, 1, 1], [], []>} : vector<8x128xf32>, vector<128x128xf32>, vector<8x128xf32> -> vector<8x128xf32>
    %14 = vector.broadcast %1 : vector<1x128xf32> to vector<8x128xf32>
    %15 = arith.addf %13, %14 : vector<8x128xf32>
    %16 = math.tanh %15 : vector<8x128xf32>
    %17 = tpu.iota {dimensions = array<i32: 1>} : vector<1x128xi32>
    %c32_i32 = arith.constant 32 : i32
    %18 = vector.broadcast %c32_i32 : i32 to vector<1x128xi32>
    %19 = arith.cmpi slt, %17, %18 : vector<1x128xi32>
    %cst_11 = arith.constant 9.99999997E-7 : f32
    %cst_12 = arith.constant 0.000000e+00 : f32
    %20 = vector.broadcast %cst_11 : f32 to vector<1x128xf32>
    %21 = vector.broadcast %cst_12 : f32 to vector<1x128xf32>
    %22 = arith.select %19, %20, %21 : vector<1x128xi1>, vector<1x128xf32>
    %23 = arith.subf %6, %11 : vector<8x128xf32>
    %24 = vector.broadcast %22 : vector<1x128xf32> to vector<8x128xf32>
    %25 = arith.addf %23, %24 : vector<8x128xf32>
    %26 = arith.mulf %25, %25 : vector<8x128xf32>
    %cst_13 = arith.constant dense<0.000000e+00> : vector<8xf32>
    %27 = vector.multi_reduction <add>, %26, %cst_13 [1] : vector<8x128xf32> to vector<8xf32>
    %28 = math.sqrt %27 : vector<8xf32>
    %29 = arith.subf %6, %16 : vector<8x128xf32>
    %30 = vector.broadcast %22 : vector<1x128xf32> to vector<8x128xf32>
    %31 = arith.addf %29, %30 : vector<8x128xf32>
    %32 = arith.mulf %31, %31 : vector<8x128xf32>
    %cst_14 = arith.constant dense<0.000000e+00> : vector<8xf32>
    %33 = vector.multi_reduction <add>, %32, %cst_14 [1] : vector<8x128xf32> to vector<8xf32>
    %34 = math.sqrt %33 : vector<8xf32>
    %35 = arith.subf %28, %34 : vector<8xf32>
    %cst_15 = arith.constant 1.000000e+00 : f32
    %36 = vector.broadcast %cst_15 : f32 to vector<8xf32>
    %37 = arith.addf %35, %36 : vector<8xf32>
    %cst_16 = arith.constant 0.000000e+00 : f32
    %38 = vector.broadcast %cst_16 : f32 to vector<8xf32>
    %39 = arith.maximumf %37, %38 : vector<8xf32>
    %40 = vector.shape_cast %39 : vector<8xf32> to vector<1x8xf32>
    %c0_17 = arith.constant 0 : index
    %c0_18 = arith.constant 0 : index
    %41 = vector.load %arg6[%c0_17, %c0_18] : memref<1x8xf32, #tpu.memory_space<vmem>>, vector<1x8xf32>
    tpu.vector_store %arg6[%c0_17, %c0_18], %40 {strides = array<i32>} : memref<1x8xf32, #tpu.memory_space<vmem>>, vector<1x8xf32>,
    return
  }
  func.func @transform_0(%arg0: i32) -> (i32, i32) {
    %c0_i32 = arith.constant 0 : i32
    %c0_i32_0 = arith.constant 0 : i32
    return %arg0, %c0_i32 : i32, i32
  }
  func.func @transform_1(%arg0: i32) -> (i32, i32) {
    %c0_i32 = arith.constant 0 : i32
    %c0_i32_0 = arith.constant 0 : i32
    return %arg0, %c0_i32 : i32, i32
  }
  func.func @transform_2(%arg0: i32) -> (i32, i32) {
    %c0_i32 = arith.constant 0 : i32
    %c0_i32_0 = arith.constant 0 : i32
    return %arg0, %c0_i32 : i32, i32
  }
  func.func @transform_3(%arg0: i32) -> (i32, i32) {
    %c0_i32 = arith.constant 0 : i32
    %c0_i32_0 = arith.constant 0 : i32
    %c0_i32_1 = arith.constant 0 : i32
    return %c0_i32, %c0_i32_0 : i32, i32
  }
  func.func @transform_4(%arg0: i32) -> (i32, i32) {
    %c0_i32 = arith.constant 0 : i32
    %c0_i32_0 = arith.constant 0 : i32
    %c0_i32_1 = arith.constant 0 : i32
    return %c0_i32, %c0_i32_0 : i32, i32
  }
  func.func @transform_5(%arg0: i32) -> (i32, i32) {
    %c0_i32 = arith.constant 0 : i32
    %c0_i32_0 = arith.constant 0 : i32
    return %arg0, %c0_i32 : i32, i32
  }
}

</mosaic_0001>

<llo_original>
// kernel: tpu_custom_call.1
$region0: #{tpu_custom_call.1}
  #allocation0 [shape = 'u32[]', space=smem, size = 0x4, offset = 0x4, fixed_abs, tag = 'smem constant byte address 0x4 - core index']
  #allocation1 [shape = 'u32[144,128]{1,0:T(1,128)}', space=vmem, size = 0x12000, scoped, tag = 'internal scratch']
  %s0 = inlined_call_operand.hbm [shape: f32[8,128], index: 0, kind: input, shape index: {}]
  %s1 = inlined_call_operand.hbm [shape: f32[8,128], index: 1, kind: input, shape index: {}]
  %s2 = inlined_call_operand.hbm [shape: f32[8,128], index: 2, kind: input, shape index: {}]
  %s3 = inlined_call_operand.hbm [shape: f32[128,128], index: 3, kind: input, shape index: {}]
  %s4 = inlined_call_operand.vmem [shape: f32[1,128], index: 4, kind: input, shape index: {}]
  %s5 = inlined_call_operand.hbm [shape: f32[1,8], index: 5, kind: output, shape index: {}]
  %s6 = sld [smem:[#allocation0]]
  $region46: #{tpu_custom_call.1} parent=0
    _
  %s8 = ssub.s32 1, %s6
  %s9 = scalar_select 0, %s8, %s6
  $region1: #{tpu_custom_call.1} parent=0
    #allocation2 [shape = 'u8[4096]{0}', space=vmem, size = 0x1000, scoped, tag = 'input window, operand 0, single buffered']
    #allocation3 [shape = 's32[1]{0}', space=sflag, size = 0x4, scoped, tag = 'scoped memory for tpu_custom_call.1']
    #allocation4 [shape = 's32[1]{0}', space=sflag, size = 0x4, scoped, tag = 'scoped memory for tpu_custom_call.1']
    #allocation5 [shape = 'u8[4096]{0}', space=vmem, size = 0x1000, scoped, tag = 'input window, operand 1, single buffered']
    #allocation6 [shape = 's32[1]{0}', space=sflag, size = 0x4, scoped, tag = 'scoped memory for tpu_custom_call.1']
    #allocation7 [shape = 'u8[4096]{0}', space=vmem, size = 0x1000, scoped, tag = 'input window, operand 2, single buffered']
    #allocation8 [shape = 'u8[65536]{0}', space=vmem, size = 0x10000, scoped, tag = 'input window, operand 3, single buffered']
    #allocation9 [shape = 's32[1]{0}', space=sflag, size = 0x4, scoped, tag = 'scoped memory for tpu_custom_call.1']
    #allocation10 [shape = 'u8[512]{0}', space=vmem, size = 0x400, scoped, tag = 'output window, operand 0, single buffered']
    %10 = vsyncpa [#allocation3], 0
    %11 = vsyncpa [#allocation6], 0
    %12 = vsyncpa [#allocation9], 0
    %13 = vsyncpa [#allocation4], 0
    // Predicated region
    $region2: #{tpu_custom_call.1} parent=1 // pred_check
      _
    $region3: #{tpu_custom_call.1} parent=1 // pred_check_branch
      %15 = sbr.rel (0) target = $region5
    $region4: #{tpu_custom_call.1} parent=1 // pred_region
      %s17 = ssub.s32 128, 128
      %18 = vsyncadd [#allocation3], %s17
      %s20 = sshll.u32 [#allocation2], 4
      %s21 = int_to_ptr.vmem [resolvable:$true] %s20
      %23 = dma.hbm_to_vmem [thread:$0]  %s0, 128, %s21, [#allocation3]
    $region5: #{tpu_custom_call.1} parent=1 // pred_fallthru
      _
    // Predicated region
    $region6: #{tpu_custom_call.1} parent=1 // pred_check
      _
    $region7: #{tpu_custom_call.1} parent=1 // pred_check_branch
      %25 = sbr.rel (0) target = $region9
    $region8: #{tpu_custom_call.1} parent=1 // pred_region
      %s27 = ssub.s32 128, 128
      %28 = vsyncadd [#allocation6], %s27
      %s30 = sshll.u32 [#allocation5], 4
      %s31 = int_to_ptr.vmem [resolvable:$true] %s30
      %33 = dma.hbm_to_vmem [thread:$0]  %s1, 128, %s31, [#allocation6]
    $region9: #{tpu_custom_call.1} parent=1 // pred_fallthru
      _
    // Predicated region
    $region10: #{tpu_custom_call.1} parent=1 // pred_check
      _
    $region11: #{tpu_custom_call.1} parent=1 // pred_check_branch
      %35 = sbr.rel (0) target = $region13
    $region12: #{tpu_custom_call.1} parent=1 // pred_region
      %s37 = ssub.s32 128, 128
      %38 = vsyncadd [#allocation6], %s37
      %s40 = sshll.u32 [#allocation7], 4
      %s41 = int_to_ptr.vmem [resolvable:$true] %s40
      %43 = dma.hbm_to_vmem [thread:$0]  %s2, 128, %s41, [#allocation6]
    $region13: #{tpu_custom_call.1} parent=1 // pred_fallthru
      _
    // Predicated region
    $region14: #{tpu_custom_call.1} parent=1 // pred_check
      _
    $region15: #{tpu_custom_call.1} parent=1 // pred_check_branch
      %45 = sbr.rel (0) target = $region17
    $region16: #{tpu_custom_call.1} parent=1 // pred_region
      %s47 = ssub.s32 2048, 2048
      %48 = vsyncadd [#allocation9], %s47
      %s49 = sshll.u32 [#allocation8], 4
      %s50 = int_to_ptr.vmem [resolvable:$true] %s49
      %55 = dma.hbm_to_vmem [thread:$0]  %s3, 2048, %s50, [#allocation9], 128, 128, 8
    $region17: #{tpu_custom_call.1} parent=1 // pred_fallthru
      _
    // Predicated region
    $region18: #{tpu_custom_call.1} parent=1 // pred_check
      _
    $region19: #{tpu_custom_call.1} parent=1 // pred_check_branch
      %57 = sbr.rel (0) target = $region21
    $region20: #{tpu_custom_call.1} parent=1 // pred_region
      _
    $region21: #{tpu_custom_call.1} parent=1 // pred_fallthru
      _
    // Predicated region
    $region22: #{tpu_custom_call.1} parent=1 // pred_check
      _
    $region23: #{tpu_custom_call.1} parent=1 // pred_check_branch
      %59 = sbr.rel (0) target = $region25
    $region24: #{tpu_custom_call.1} parent=1 // pred_region
      %60 = dma.done [#allocation3], 128
    $region25: #{tpu_custom_call.1} parent=1 // pred_fallthru
      _
    // Predicated region
    $region26: #{tpu_custom_call.1} parent=1 // pred_check
      _
    $region27: #{tpu_custom_call.1} parent=1 // pred_check_branch
      %62 = sbr.rel (0) target = $region29
    $region28: #{tpu_custom_call.1} parent=1 // pred_region
      %63 = dma.done [#allocation6], 128
    $region29: #{tpu_custom_call.1} parent=1 // pred_fallthru
      _
    // Predicated region
    $region30: #{tpu_custom_call.1} parent=1 // pred_check
      _
    $region31: #{tpu_custom_call.1} parent=1 // pred_check_branch
      %65 = sbr.rel (0) target = $region33
    $region32: #{tpu_custom_call.1} parent=1 // pred_region
      %66 = dma.done [#allocation6], 128
    $region33: #{tpu_custom_call.1} parent=1 // pred_fallthru
      _
    // Predicated region
    $region34: #{tpu_custom_call.1} parent=1 // pred_check
      _
    $region35: #{tpu_custom_call.1} parent=1 // pred_check_branch
      %68 = sbr.rel (0) target = $region37
    $region36: #{tpu_custom_call.1} parent=1 // pred_region
      %69 = dma.done [#allocation9], 2048
    $region37: #{tpu_custom_call.1} parent=1 // pred_fallthru
      _
    %v70 = vld [vmem:[#allocation8] sm:$0xff]
    %v71 = vld [vmem:[#allocation8 + $0x8] sm:$0xff]
    %v72 = vld [vmem:[#allocation8 + $0x10] sm:$0xff]
    %v73 = vld [vmem:[#allocation8 + $0x18] sm:$0xff]
    %v74 = vld [vmem:[#allocation8 + $0x20] sm:$0xff]
    %v75 = vld [vmem:[#allocation8 + $0x28] sm:$0xff]
    %v76 = vld [vmem:[#allocation8 + $0x30] sm:$0xff]
    %v77 = vld [vmem:[#allocation8 + $0x38] sm:$0xff]
    %v78 = vld [vmem:[#allocation8 + $0x40] sm:$0xff]
    %v79 = vld [vmem:[#allocation8 + $0x48] sm:$0xff]
    %v80 = vld [vmem:[#allocation8 + $0x50] sm:$0xff]
    %v81 = vld [vmem:[#allocation8 + $0x58] sm:$0xff]
    %v82 = vld [vmem:[#allocation8 + $0x60] sm:$0xff]
    %v83 = vld [vmem:[#allocation8 + $0x68] sm:$0xff]
    %v84 = vld [vmem:[#allocation8 + $0x70] sm:$0xff]
    %v85 = vld [vmem:[#allocation8 + $0x78] sm:$0xff]
    %v86 = vld [vmem:[%s4] sm:$0x1]
    %v87 = vld [vmem:[#allocation2] sm:$0xff]
    %v89 = vlaneseq
    %v90 = vshrl.u32 %v89, 7
    %v91 = vsub.s32 0, %v90
    %v92 = vrot.slane %v86, %v91
    %94 = vmatprep.subr.mxu0 0.0
    %95 = vmatpush1.msra.mxu0 %v70
    %96 = vmatprep.subr.mxu0 0.0
    %97 = vmatpush1.msra.mxu0 %v71
    %98 = vmatprep.subr.mxu0 0.0
    %99 = vmatpush1.msra.mxu0 %v72
    %100 = vmatprep.subr.mxu0 0.0
    %101 = vmatpush1.msra.mxu0 %v73
    %102 = vmatprep.subr.mxu0 0.0
    %103 = vmatpush1.msra.mxu0 %v74
    %104 = vmatprep.subr.mxu0 0.0
    %105 = vmatpush1.msra.mxu0 %v75
    %106 = vmatprep.subr.mxu0 0.0
    %107 = vmatpush1.msra.mxu0 %v76
    %108 = vmatprep.subr.mxu0 0.0
    %109 = vmatpush1.msra.mxu0 %v77
    %110 = vmatprep.subr.mxu0 0.0
    %111 = vmatpush1.msra.mxu0 %v78
    %112 = vmatprep.subr.mxu0 0.0
    %113 = vmatpush1.msra.mxu0 %v79
    %114 = vmatprep.subr.mxu0 0.0
    %115 = vmatpush1.msra.mxu0 %v80
    %116 = vmatprep.subr.mxu0 0.0
    %117 = vmatpush1.msra.mxu0 %v81
    %118 = vmatprep.subr.mxu0 0.0
    %119 = vmatpush1.msra.mxu0 %v82
    %120 = vmatprep.subr.mxu0 0.0
    %121 = vmatpush1.msra.mxu0 %v83
    %122 = vmatprep.subr.mxu0 0.0
    %123 = vmatpush1.msra.mxu0 %v84
    %124 = vmatprep.subr.mxu0 0.0
    %125 = vmatpush1.msra.mxu0 %v85
    %126 = vmatprep.subr.mxu0 0.0
    %127 = vmatpush1.msra.mxu0 0.0
    %128 = vmatprep.subr.mxu0 0.0
    %129 = vmatpush1.msra.mxu0 0.0
    %130 = vmatprep.subr.mxu0 0.0
    %131 = vmatpush1.msra.mxu0 0.0
    %132 = vmatprep.subr.mxu0 0.0
    %133 = vmatpush1.msra.mxu0 0.0
    %134 = vmatprep.subr.mxu0 0.0
    %135 = vmatpush1.msra.mxu0 0.0
    %136 = vmatprep.subr.mxu0 0.0
    %137 = vmatpush1.msra.mxu0 0.0
    %138 = vmatprep.subr.mxu0 0.0
    %139 = vmatpush1.msra.mxu0 0.0
    %140 = vmatprep.subr.mxu0 0.0
    %141 = vmatpush1.msra.mxu0 0.0
    %142 = vmatprep.subr.mxu0 0.0
    %143 = vmatpush1.msra.mxu0 0.0
    %144 = vmatprep.subr.mxu0 0.0
    %145 = vmatpush1.msra.mxu0 0.0
    %146 = vmatprep.subr.mxu0 0.0
    %147 = vmatpush1.msra.mxu0 0.0
    %148 = vmatprep.subr.mxu0 0.0
    %149 = vmatpush1.msra.mxu0 0.0
    %150 = vmatprep.subr.mxu0 0.0
    %151 = vmatpush1.msra.mxu0 0.0
    %152 = vmatprep.subr.mxu0 0.0
    %153 = vmatpush1.msra.mxu0 0.0
    %154 = vmatprep.subr.mxu0 0.0
    %155 = vmatpush1.msra.mxu0 0.0
    %156 = vmatprep.subr.mxu0 0.0
    %157 = vmatpush1.msra.mxu0 0.0
    %158 = vmatprep.mubr.f32.mxu0 0.0
    %159 = vmatmul.mubr.f32.gmra.mrb[0].mxu0 %v87
    %v160 = vpop.f32.mrb[0].mxu0
    %v161 = vadd.f32 %v92, %v160
    %v162 = vpop.f32.mrb[0].mxu0
    %163 = vdwg.mxu0
    %v164 = vtanh.pop %v161
    %v165 = vld [vmem:[#allocation5] sm:$0xff]
    %166 = vmatprep.subr.mxu0 0.0
    %167 = vmatpush1.msra.mxu0 %v70
    %168 = vmatprep.subr.mxu0 0.0
    %169 = vmatpush1.msra.mxu0 %v71
    %170 = vmatprep.subr.mxu0 0.0
    %171 = vmatpush1.msra.mxu0 %v72
    %172 = vmatprep.subr.mxu0 0.0
    %173 = vmatpush1.msra.mxu0 %v73
    %174 = vmatprep.subr.mxu0 0.0
    %175 = vmatpush1.msra.mxu0 %v74
    %176 = vmatprep.subr.mxu0 0.0
    %177 = vmatpush1.msra.mxu0 %v75
    %178 = vmatprep.subr.mxu0 0.0
    %179 = vmatpush1.msra.mxu0 %v76
    %180 = vmatprep.subr.mxu0 0.0
    %181 = vmatpush1.msra.mxu0 %v77
    %182 = vmatprep.subr.mxu0 0.0
    %183 = vmatpush1.msra.mxu0 %v78
    %184 = vmatprep.subr.mxu0 0.0
    %185 = vmatpush1.msra.mxu0 %v79
    %186 = vmatprep.subr.mxu0 0.0
    %187 = vmatpush1.msra.mxu0 %v80
    %188 = vmatprep.subr.mxu0 0.0
    %189 = vmatpush1.msra.mxu0 %v81
    %190 = vmatprep.subr.mxu0 0.0
    %191 = vmatpush1.msra.mxu0 %v82
    %192 = vmatprep.subr.mxu0 0.0
    %193 = vmatpush1.msra.mxu0 %v83
    %194 = vmatprep.subr.mxu0 0.0
    %195 = vmatpush1.msra.mxu0 %v84
    %196 = vmatprep.subr.mxu0 0.0
    %197 = vmatpush1.msra.mxu0 %v85
    %198 = vmatprep.subr.mxu0 0.0
    %199 = vmatpush1.msra.mxu0 0.0
    %200 = vmatprep.subr.mxu0 0.0
    %201 = vmatpush1.msra.mxu0 0.0
    %202 = vmatprep.subr.mxu0 0.0
    %203 = vmatpush1.msra.mxu0 0.0
    %204 = vmatprep.subr.mxu0 0.0
    %205 = vmatpush1.msra.mxu0 0.0
    %206 = vmatprep.subr.mxu0 0.0
    %207 = vmatpush1.msra.mxu0 0.0
    %208 = vmatprep.subr.mxu0 0.0
    %209 = vmatpush1.msra.mxu0 0.0
    %210 = vmatprep.subr.mxu0 0.0
    %211 = vmatpush1.msra.mxu0 0.0
    %212 = vmatprep.subr.mxu0 0.0
    %213 = vmatpush1.msra.mxu0 0.0
    %214 = vmatprep.subr.mxu0 0.0
    %215 = vmatpush1.msra.mxu0 0.0
    %216 = vmatprep.subr.mxu0 0.0
    %217 = vmatpush1.msra.mxu0 0.0
    %218 = vmatprep.subr.mxu0 0.0
    %219 = vmatpush1.msra.mxu0 0.0
    %220 = vmatprep.subr.mxu0 0.0
    %221 = vmatpush1.msra.mxu0 0.0
    %222 = vmatprep.subr.mxu0 0.0
    %223 = vmatpush1.msra.mxu0 0.0
    %224 = vmatprep.subr.mxu0 0.0
    %225 = vmatpush1.msra.mxu0 0.0
    %226 = vmatprep.subr.mxu0 0.0
    %227 = vmatpush1.msra.mxu0 0.0
    %228 = vmatprep.subr.mxu0 0.0
    %229 = vmatpush1.msra.mxu0 0.0
    %230 = vmatprep.mubr.f32.mxu0 0.0
    %231 = vmatmul.mubr.f32.gmra.mrb[0].mxu0 %v165
    %v232 = vpop.f32.mrb[0].mxu0
    %v233 = vadd.f32 %v92, %v232
    %v234 = vpop.f32.mrb[0].mxu0
    %235 = vdwg.mxu0
    %v236 = vtanh.pop %v233
    %v237 = vld [vmem:[#allocation7] sm:$0xff]
    %238 = vmatprep.subr.mxu0 0.0
    %239 = vmatpush1.msra.mxu0 %v70
    %240 = vmatprep.subr.mxu0 0.0
    %241 = vmatpush1.msra.mxu0 %v71
    %242 = vmatprep.subr.mxu0 0.0
    %243 = vmatpush1.msra.mxu0 %v72
    %244 = vmatprep.subr.mxu0 0.0
    %245 = vmatpush1.msra.mxu0 %v73
    %246 = vmatprep.subr.mxu0 0.0
    %247 = vmatpush1.msra.mxu0 %v74
    %248 = vmatprep.subr.mxu0 0.0
    %249 = vmatpush1.msra.mxu0 %v75
    %250 = vmatprep.subr.mxu0 0.0
    %251 = vmatpush1.msra.mxu0 %v76
    %252 = vmatprep.subr.mxu0 0.0
    %253 = vmatpush1.msra.mxu0 %v77
    %254 = vmatprep.subr.mxu0 0.0
    %255 = vmatpush1.msra.mxu0 %v78
    %256 = vmatprep.subr.mxu0 0.0
    %257 = vmatpush1.msra.mxu0 %v79
    %258 = vmatprep.subr.mxu0 0.0
    %259 = vmatpush1.msra.mxu0 %v80
    %260 = vmatprep.subr.mxu0 0.0
    %261 = vmatpush1.msra.mxu0 %v81
    %262 = vmatprep.subr.mxu0 0.0
    %263 = vmatpush1.msra.mxu0 %v82
    %264 = vmatprep.subr.mxu0 0.0
    %265 = vmatpush1.msra.mxu0 %v83
    %266 = vmatprep.subr.mxu0 0.0
    %267 = vmatpush1.msra.mxu0 %v84
    %268 = vmatprep.subr.mxu0 0.0
    %269 = vmatpush1.msra.mxu0 %v85
    %270 = vmatprep.subr.mxu0 0.0
    %271 = vmatpush1.msra.mxu0 0.0
    %272 = vmatprep.subr.mxu0 0.0
    %273 = vmatpush1.msra.mxu0 0.0
    %274 = vmatprep.subr.mxu0 0.0
    %275 = vmatpush1.msra.mxu0 0.0
    %276 = vmatprep.subr.mxu0 0.0
    %277 = vmatpush1.msra.mxu0 0.0
    %278 = vmatprep.subr.mxu0 0.0
    %279 = vmatpush1.msra.mxu0 0.0
    %280 = vmatprep.subr.mxu0 0.0
    %281 = vmatpush1.msra.mxu0 0.0
    %282 = vmatprep.subr.mxu0 0.0
    %283 = vmatpush1.msra.mxu0 0.0
    %284 = vmatprep.subr.mxu0 0.0
    %285 = vmatpush1.msra.mxu0 0.0
    %286 = vmatprep.subr.mxu0 0.0
    %287 = vmatpush1.msra.mxu0 0.0
    %288 = vmatprep.subr.mxu0 0.0
    %289 = vmatpush1.msra.mxu0 0.0
    %290 = vmatprep.subr.mxu0 0.0
    %291 = vmatpush1.msra.mxu0 0.0
    %292 = vmatprep.subr.mxu0 0.0
    %293 = vmatpush1.msra.mxu0 0.0
    %294 = vmatprep.subr.mxu0 0.0
    %295 = vmatpush1.msra.mxu0 0.0
    %296 = vmatprep.subr.mxu0 0.0
    %297 = vmatpush1.msra.mxu0 0.0
    %298 = vmatprep.subr.mxu0 0.0
    %299 = vmatpush1.msra.mxu0 0.0
    %300 = vmatprep.subr.mxu0 0.0
    %301 = vmatpush1.msra.mxu0 0.0
    %302 = vmatprep.mubr.f32.mxu0 0.0
    %303 = vmatmul.mubr.f32.gmra.mrb[0].mxu0 %v237
    %v304 = vpop.f32.mrb[0].mxu0
    %v305 = vadd.f32 %v92, %v304
    %v306 = vpop.f32.mrb[0].mxu0
    %307 = vdwg.mxu0
    %v308 = vtanh.pop %v305
    %v309 = vlaneseq
    %v310 = vand.u32 %v309, 127
    %vm311 = vcmp.lt.s32.totalorder %v310, 32
    %v312 = vsel %vm311, 1e-06, 0.0
    %v313 = vsub.f32 %v164, %v236
    %v314 = vadd.f32 %v313, %v312
    %v315 = vmul.f32 %v314, %v314
    %316 = vadd.xlane.f32.xlu0 %v315
    %v317 = vpop.xlane.xlu0 %316
    %v318 = vrsqrt.pop %v317
    %v319 = vmul.f32 %v317, %v318
    %vm320 = vcmp.eq.f32.partialorder %v317, inf
    %v321 = vsel %vm320, %v317, %v319
    %vm322 = vcmp.eq.f32.partialorder %v317, 0.0
    %v323 = vand.u32 %v317, 2147483648
    %v324 = vsel %vm322, %v323, %v321
    %v325 = vsub.f32 %v164, %v308
    %v326 = vadd.f32 %v325, %v312
    %v327 = vmul.f32 %v326, %v326
    %328 = vadd.xlane.f32.xlu0 %v327
    %v329 = vpop.xlane.xlu0 %328
    %v330 = vrsqrt.pop %v329
    %v331 = vmul.f32 %v329, %v330
    %vm332 = vcmp.eq.f32.partialorder %v329, inf
    %v333 = vsel %vm332, %v329, %v331
    %vm334 = vcmp.eq.f32.partialorder %v329, 0.0
    %v335 = vand.u32 %v329, 2147483648
    %v336 = vsel %vm334, %v335, %v333
    %v337 = vsub.f32 %v324, %v336
    %v338 = vadd.f32 %v337, 1.0
    %v339 = vmax.f32 %v338, 0.0
    %v341 = vlaneseq
    %v342 = vshrl.u32 %v341, 7
    %v343 = vsub.s32 %v310, %v342
    %v344 = vrot.slane %v339, %v343
    %vm346 = vcmask 57344
    %347 = vst.msk [vmem:[#allocation10] sm:$0x1] %vm346, %v344
    // Predicated region
    $region38: #{tpu_custom_call.1} parent=1 // pred_check
      _
    $region39: #{tpu_custom_call.1} parent=1 // pred_check_branch
      %349 = sbr.rel (0) target = $region41
    $region40: #{tpu_custom_call.1} parent=1 // pred_region
      %s351 = ssub.s32 16, 16
      %352 = vsyncadd [#allocation4], %s351
      %s354 = sshll.u32 [#allocation10], 4
      %s355 = int_to_ptr.vmem [resolvable:$true] %s354
      %357 = dma.vmem_to_hbm [thread:$0]  %s355, 16, %s5, [#allocation4]
    $region41: #{tpu_custom_call.1} parent=1 // pred_fallthru
      _
    // Predicated region
    $region42: #{tpu_custom_call.1} parent=1 // pred_check
      _
    $region43: #{tpu_custom_call.1} parent=1 // pred_check_branch
      %359 = sbr.rel (0) target = $region45
    $region44: #{tpu_custom_call.1} parent=1 // pred_region
      %360 = dma.done [#allocation4], 16
    $region45: #{tpu_custom_call.1} parent=1 // pred_fallthru
      _
    %361 = vsyncpa [#allocation3], 1
    %362 = vsyncpa [#allocation6], 1
    %363 = vsyncpa [#allocation9], 1
    %364 = vsyncpa [#allocation4], 1

</llo_original>
